<compile_context>
chip_gen: v6e
topology: v6e:2x2x1
jax: 0.10.0
libtpu: 0.0.40
codegen_flags: <defaults>
</compile_context>

<pallas_src>
import math

import jax
import jax.numpy as jnp
import numpy as np
from jax.experimental import pallas as pl
from jax.experimental.pallas import tpu as pltpu

NUM_L = 5
OUT_DIM = NUM_L * NUM_L  # 1 + 3 + 5 + 7 + 9 = 25
NUM_FEAT = 6             # only cols 1:7 of edge_attr are used
SUB = 8                  # sublane chunk processed per inner-loop iteration


def _round_up(x, m):
    return ((x + m - 1) // m) * m


def _sph_harm_kernel(e_ref, o_ref):
    # e_ref: (6, B, 128) — rows are original edge_attr columns 1..6.
    # o_ref: (25, B, 128).
    n_chunks = e_ref.shape[1] // SUB
    out_dtype = o_ref.dtype
    K0 = 0.5 / math.sqrt(math.pi)

    @pl.loop(0, n_chunks)
    def _(j):
        base = pl.multiple_of(j * SUB, SUB)
        sub = pl.ds(base, SUB)
        e = e_ref[:, sub, :].astype(jnp.float32)        # (6, SUB, 128)

        # r_vec = edge_attr[:, 1:4] - edge_attr[:, 4:7]
        # get_spherical_from_cartesian uses cartesian_x=1, _y=2, _z=0.
        x = e[1] - e[4]   # r_vec[:, 1]
        y = e[2] - e[5]   # r_vec[:, 2]
        z = e[0] - e[3]   # r_vec[:, 0]

        rxy2 = x * x + y * y
        r2 = rxy2 + z * z

        # Guarded reciprocal square roots (EUP) instead of sqrt + divide.
        # atan2(0, 0) == 0 in torch -> theta=0 (ct=1, st=0), phi=0 (cp=1, sp=0).
        inv_r = jnp.where(r2 > 0, jax.lax.rsqrt(r2), 0.0)
        inv_rxy = jnp.where(rxy2 > 0, jax.lax.rsqrt(rxy2), 0.0)
        rxy = rxy2 * inv_rxy                            # sqrt(rxy2), 0 at 0

        ct = jnp.where(r2 > 0, z * inv_r, 1.0)          # cos(theta)
        st = rxy * inv_r                                # sin(theta) >= 0
        cp = jnp.where(rxy2 > 0, x * inv_rxy, 1.0)      # cos(phi)
        sp = y * inv_rxy                                # sin(phi)

        # l = 0 harmonic is a constant.
        o_ref[0, sub, :] = jnp.full((SUB, 128), K0, dtype=out_dtype)

        ones = jnp.ones_like(ct)
        P_prev = [ones]          # Legendre row for l-1 (starts with l=0 row)
        P_prev2 = P_prev         # row for l-2 (unused at l=1)
        diag = ones              # P[(l,l)], updated incrementally
        cm = []                  # cos(m*phi), index m-1
        sm = []                  # sin(m*phi), index m-1

        for l in range(1, NUM_L):
            # Extend cos/sin(m*phi) recursion to order l.
            if l == 1:
                cm.append(cp)
                sm.append(sp)
            else:
                c_new = cm[-1] * cp - sm[-1] * sp
                s_new = sm[-1] * cp + cm[-1] * sp
                cm.append(c_new)
                sm.append(s_new)

            # Associated Legendre row P[(l, m)], m = 0..l (Condon–Shortley).
            row = []
            for m in range(0, l - 1):
                inv = 1.0 / (l - m)                     # constant-fold divide
                row.append(((2 * l - 1) * ct * P_prev[m]
                            - (l + m - 1) * P_prev2[m]) * inv)
            row.append((2 * l - 1) * ct * P_prev[l - 1])  # m = l-1
            diag = -(2 * l - 1) * st * diag               # m = l
            row.append(diag)

            # Emit band l immediately (interleave stores; frees P_prev2).
            K = math.sqrt((2 * l + 1) / (4.0 * math.pi))
            for m in range(-l, l + 1):
                am = abs(m)
                c = l * l + (m + l)
                if m == 0:
                    val = K * row[0]
                else:
                    norm = K * math.sqrt(
                        2.0 * math.factorial(l - am) / math.factorial(l + am))
                    trig = cm[am - 1] if m > 0 else sm[am - 1]
                    val = norm * row[am] * trig
                o_ref[c, sub, :] = val.astype(out_dtype)

            P_prev2, P_prev = P_prev, row


def spherical_harmonics_basis(edge_attr, tile_e=32768, out_dtype=None,
                              keep_transposed=False):
    """Pallas TPU implementation of SphericalHarmonicsBasis(num_l=5).forward.

    tile_e: max edges per grid step (clamped to the problem size).
    out_dtype: output dtype (e.g. jnp.bfloat16 to cut HBM writeback ~2x);
               defaults to edge_attr.dtype. Math is always f32 inside.
    keep_transposed: if True, return [25, E_pad//128, 128] (edges-on-lanes)
               and skip the wrapper-side transpose back to [E, 25].
    """
    E, F = edge_attr.shape
    assert F >= 7, "edge_attr must have at least 7 feature columns"
    if out_dtype is None:
        out_dtype = edge_attr.dtype

    # Clamp the tile to the problem size so small E doesn't pad to a huge tile.
    tile_e = min(int(tile_e), _round_up(E, 1024))
    tile_e = _round_up(tile_e, 1024)

    # Only the 6 used columns are streamed through the kernel.
    feats = edge_attr[:, 1:7]

    n_tiles = pl.cdiv(E, tile_e)
    E_pad = n_tiles * tile_e
    if E_pad != E:
        feats = jnp.pad(feats, ((0, E_pad - E), (0, 0)))

    # Edges-on-lanes: [6, E_pad//128, 128] dense (sublane x lane) blocks.
    feats_t = feats.T.reshape(NUM_FEAT, E_pad // 128, 128)
    B = tile_e // 128

    in_bytes = NUM_FEAT * jnp.dtype(feats.dtype).itemsize
    out_bytes = OUT_DIM * jnp.dtype(out_dtype).itemsize
    cost = pl.CostEstimate(
        flops=120 * E_pad,
        transcendentals=2 * E_pad,
        bytes_accessed=(in_bytes + out_bytes) * E_pad,
    )

    out_t = pl.pallas_call(
        _sph_harm_kernel,
        out_shape=jax.ShapeDtypeStruct((OUT_DIM, E_pad // 128, 128), out_dtype),
        grid_spec=pltpu.PrefetchScalarGridSpec(
            num_scalar_prefetch=0,
            grid=(n_tiles,),
            in_specs=[pl.BlockSpec((NUM_FEAT, B, 128), lambda i: (0, i, 0))],
            out_specs=pl.BlockSpec((OUT_DIM, B, 128), lambda i: (0, i, 0)),
        ),
        compiler_params=pltpu.CompilerParams(
            dimension_semantics=("parallel",),
            vmem_limit_bytes=32 * 1024 * 1024,
        ),
        cost_estimate=cost,
    )(feats_t)

    if keep_transposed:
        return out_t  # consumer keeps edges-on-lanes layout, no extra transpose

    # Back to the module's [E, 25] layout (drop padded edges).
    # TODO(synk): fuse the downstream contraction over the 25-dim to avoid this
    # extra HBM read+write when integrated into the full model.
    return out_t.reshape(OUT_DIM, E_pad).T[:E, :]


def _assoc_legendre_table(ct, st, num_l):
    """P_l^m(cos theta), Condon-Shortley phase, for the pure-JAX reference."""
    P = {}
    one = jnp.ones_like(ct)
    P[(0, 0)] = one
    st_pow = one
    dfact = 1
    for m in range(1, num_l):
        st_pow = st_pow * st
        dfact = dfact * (2 * m - 1)
        P[(m, m)] = ((-1.0) ** m) * dfact * st_pow
    for m in range(0, num_l - 1):
        P[(m + 1, m)] = (2 * m + 1) * ct * P[(m, m)]
    for l in range(2, num_l):
        for m in range(0, l - 1):
            P[(l, m)] = ((2 * l - 1) * ct * P[(l - 1, m)]
                         - (l + m - 1) * P[(l - 2, m)]) / (l - m)
    return P


def _reference(edge_attr, num_l=NUM_L):
    """Pure-JAX reference mirroring the torch module (atan2 -> cos/sin)."""
    rv = edge_attr[:, 1:4] - edge_attr[:, 4:7]
    x, y, z = rv[:, 1], rv[:, 2], rv[:, 0]
    theta = jnp.arctan2(jnp.sqrt(x * x + y * y), z)
    phi = jnp.arctan2(y, x)
    ct = jnp.cos(theta)
    st = jnp.sqrt(jnp.clip(1.0 - ct * ct, 0.0, None))
    P = _assoc_legendre_table(ct, st, num_l)
    cols = []
    for l in range(num_l):
        K = math.sqrt((2 * l + 1) / (4.0 * math.pi))
        for m in range(-l, l + 1):
            am = abs(m)
            if m == 0:
                cols.append(K * P[(l, 0)])
            else:
                norm = K * math.sqrt(
                    2.0 * math.factorial(l - am) / math.factorial(l + am))
                trig = jnp.cos(m * phi) if m > 0 else jnp.sin(am * phi)
                cols.append(norm * P[(l, am)] * trig)
    return jnp.stack(cols, axis=-1)


if __name__ == "__main__":
    key = jax.random.PRNGKey(0)

    # Small case (exercises padding + tile clamping: 200 -> one 1024 tile).
    E1, F = 200, 7
    edge_attr1 = jax.random.normal(key, (E1, F), dtype=jnp.float32)
    out1 = jax.block_until_ready(spherical_harmonics_basis(edge_attr1))
    assert out1.shape == (E1, OUT_DIM) and out1.dtype == jnp.float32
    ref1 = jax.block_until_ready(_reference(edge_attr1))
    np.testing.assert_allclose(np.asarray(out1), np.asarray(ref1),
                               rtol=1e-4, atol=1e-4)

    # Larger case (exercises the inner sublane loop: 2500 -> 3072-edge tile).
    E2 = 2500
    edge_attr2 = jax.random.normal(jax.random.PRNGKey(1), (E2, F),
                                   dtype=jnp.float32)
    out2 = jax.block_until_ready(spherical_harmonics_basis(edge_attr2))
    assert out2.shape == (E2, OUT_DIM)
    ref2 = jax.block_until_ready(_reference(edge_attr2))
    np.testing.assert_allclose(np.asarray(out2), np.asarray(ref2),
                               rtol=1e-4, atol=1e-4)

    print("KERNEL_OK")
</pallas_src>

<mosaic_0001>
module attributes {stable_mosaic.version = 11 : i64} {
  func.func @_sph_harm_kernel(%arg0: i32, %arg1: memref<6x8x128xf32, #tpu.memory_space<vmem>>, %arg2: memref<25x8x128xf32, #tpu.memory_space<vmem>>) attributes {dimension_semantics = [#tpu.dimension_semantics<parallel>], iteration_bounds = array<i64: 1>, scalar_prefetch = 0 : i64, scratch_operands = 0 : i64, tpu.core_type = #tpu.core_type<tc>, window_params = [{transform_indices = @transform_0, window_bounds = array<i64: 6, 8, 128>}, {transform_indices = @transform_1, window_bounds = array<i64: 25, 8, 128>}]} {
    %c0_i32 = arith.constant 0 : i32
    %c1_i32 = arith.constant 1 : i32
    %0 = arith.muli %c0_i32, %c1_i32 : i32
    %c0_i32_0 = arith.constant 0 : i32
    %1 = arith.addi %c0_i32_0, %0 : i32
    %c8_i32 = arith.constant 8 : i32
    %2 = arith.muli %1, %c8_i32 : i32
    %3 = tpu.assume_multiple %2, 8 : i32
    %c0 = arith.constant 0 : index
    %4 = arith.index_cast %3 : i32 to index
    %c0_1 = arith.constant 0 : index
    %5 = vector.load %arg1[%c0, %4, %c0_1] : memref<6x8x128xf32, #tpu.memory_space<vmem>>, vector<6x8x128xf32>
    %6 = vector.extract_strided_slice %5 {offsets = [1, 0, 0], sizes = [1, 8, 128], strides = [1, 1, 1]} : vector<6x8x128xf32> to vector<1x8x128xf32>
    %7 = vector.shape_cast %6 : vector<1x8x128xf32> to vector<8x128xf32>
    %8 = vector.extract_strided_slice %5 {offsets = [4, 0, 0], sizes = [1, 8, 128], strides = [1, 1, 1]} : vector<6x8x128xf32> to vector<1x8x128xf32>
    %9 = vector.shape_cast %8 : vector<1x8x128xf32> to vector<8x128xf32>
    %10 = arith.subf %7, %9 : vector<8x128xf32>
    %11 = vector.extract_strided_slice %5 {offsets = [2, 0, 0], sizes = [1, 8, 128], strides = [1, 1, 1]} : vector<6x8x128xf32> to vector<1x8x128xf32>
    %12 = vector.shape_cast %11 : vector<1x8x128xf32> to vector<8x128xf32>
    %13 = vector.extract_strided_slice %5 {offsets = [5, 0, 0], sizes = [1, 8, 128], strides = [1, 1, 1]} : vector<6x8x128xf32> to vector<1x8x128xf32>
    %14 = vector.shape_cast %13 : vector<1x8x128xf32> to vector<8x128xf32>
    %15 = arith.subf %12, %14 : vector<8x128xf32>
    %16 = vector.extract_strided_slice %5 {offsets = [0, 0, 0], sizes = [1, 8, 128], strides = [1, 1, 1]} : vector<6x8x128xf32> to vector<1x8x128xf32>
    %17 = vector.shape_cast %16 : vector<1x8x128xf32> to vector<8x128xf32>
    %18 = vector.extract_strided_slice %5 {offsets = [3, 0, 0], sizes = [1, 8, 128], strides = [1, 1, 1]} : vector<6x8x128xf32> to vector<1x8x128xf32>
    %19 = vector.shape_cast %18 : vector<1x8x128xf32> to vector<8x128xf32>
    %20 = arith.subf %17, %19 : vector<8x128xf32>
    %21 = arith.mulf %10, %10 : vector<8x128xf32>
    %22 = arith.mulf %15, %15 : vector<8x128xf32>
    %23 = arith.addf %21, %22 : vector<8x128xf32>
    %24 = arith.mulf %20, %20 : vector<8x128xf32>
    %25 = arith.addf %23, %24 : vector<8x128xf32>
    %cst = arith.constant 0.000000e+00 : f32
    %26 = vector.broadcast %cst : f32 to vector<8x128xf32>
    %27 = arith.cmpf ogt, %25, %26 : vector<8x128xf32>
    %28 = math.rsqrt %25 : vector<8x128xf32>
    %cst_2 = arith.constant 0.000000e+00 : f32
    %29 = vector.broadcast %cst_2 : f32 to vector<8x128xf32>
    %30 = arith.select %27, %28, %29 : vector<8x128xi1>, vector<8x128xf32>
    %cst_3 = arith.constant 0.000000e+00 : f32
    %31 = vector.broadcast %cst_3 : f32 to vector<8x128xf32>
    %32 = arith.cmpf ogt, %23, %31 : vector<8x128xf32>
    %33 = math.rsqrt %23 : vector<8x128xf32>
    %cst_4 = arith.constant 0.000000e+00 : f32
    %34 = vector.broadcast %cst_4 : f32 to vector<8x128xf32>
    %35 = arith.select %32, %33, %34 : vector<8x128xi1>, vector<8x128xf32>
    %36 = arith.mulf %23, %35 : vector<8x128xf32>
    %cst_5 = arith.constant 0.000000e+00 : f32
    %37 = vector.broadcast %cst_5 : f32 to vector<8x128xf32>
    %38 = arith.cmpf ogt, %25, %37 : vector<8x128xf32>
    %39 = arith.mulf %20, %30 : vector<8x128xf32>
    %cst_6 = arith.constant 1.000000e+00 : f32
    %40 = vector.broadcast %cst_6 : f32 to vector<8x128xf32>
    %41 = arith.select %38, %39, %40 : vector<8x128xi1>, vector<8x128xf32>
    %42 = arith.mulf %36, %30 : vector<8x128xf32>
    %cst_7 = arith.constant 0.000000e+00 : f32
    %43 = vector.broadcast %cst_7 : f32 to vector<8x128xf32>
    %44 = arith.cmpf ogt, %23, %43 : vector<8x128xf32>
    %45 = arith.mulf %10, %35 : vector<8x128xf32>
    %cst_8 = arith.constant 1.000000e+00 : f32
    %46 = vector.broadcast %cst_8 : f32 to vector<8x128xf32>
    %47 = arith.select %44, %45, %46 : vector<8x128xi1>, vector<8x128xf32>
    %48 = arith.mulf %15, %35 : vector<8x128xf32>
    %cst_9 = arith.constant 0.282094806 : f32
    %49 = vector.broadcast %cst_9 : f32 to vector<8x128xf32>
    %c0_10 = arith.constant 0 : index
    %50 = arith.index_cast %3 : i32 to index
    %c0_11 = arith.constant 0 : index
    %51 = vector.load %arg2[%c0_10, %50, %c0_11] : memref<25x8x128xf32, #tpu.memory_space<vmem>>, vector<1x8x128xf32>
    %52 = vector.shape_cast %51 : vector<1x8x128xf32> to vector<8x128xf32>
    %53 = vector.shape_cast %49 : vector<8x128xf32> to vector<1x8x128xf32>
    tpu.vector_store %arg2[%c0_10, %50, %c0_11], %53 {strides = array<i32>} : memref<25x8x128xf32, #tpu.memory_space<vmem>>, vector<1x8x128xf32>,
    %cst_12 = arith.constant 1.000000e+00 : f32
    %54 = vector.broadcast %cst_12 : f32 to vector<8x128xf32>
    %cst_13 = arith.constant 1.000000e+00 : f32
    %55 = vector.broadcast %cst_13 : f32 to vector<8x128xf32>
    %56 = arith.mulf %55, %41 : vector<8x128xf32>
    %57 = arith.mulf %56, %54 : vector<8x128xf32>
    %cst_14 = arith.constant -1.000000e+00 : f32
    %58 = vector.broadcast %cst_14 : f32 to vector<8x128xf32>
    %59 = arith.mulf %58, %42 : vector<8x128xf32>
    %60 = arith.mulf %59, %54 : vector<8x128xf32>
    %cst_15 = arith.constant 0.488602519 : f32
    %61 = vector.broadcast %cst_15 : f32 to vector<8x128xf32>
    %62 = arith.mulf %61, %60 : vector<8x128xf32>
    %63 = arith.mulf %62, %48 : vector<8x128xf32>
    %c1 = arith.constant 1 : index
    %64 = arith.index_cast %3 : i32 to index
    %c0_16 = arith.constant 0 : index
    %65 = vector.load %arg2[%c1, %64, %c0_16] : memref<25x8x128xf32, #tpu.memory_space<vmem>>, vector<1x8x128xf32>
    %66 = vector.shape_cast %65 : vector<1x8x128xf32> to vector<8x128xf32>
    %67 = vector.shape_cast %63 : vector<8x128xf32> to vector<1x8x128xf32>
    tpu.vector_store %arg2[%c1, %64, %c0_16], %67 {strides = array<i32>} : memref<25x8x128xf32, #tpu.memory_space<vmem>>, vector<1x8x128xf32>,
    %cst_17 = arith.constant 0.488602519 : f32
    %68 = vector.broadcast %cst_17 : f32 to vector<8x128xf32>
    %69 = arith.mulf %68, %57 : vector<8x128xf32>
    %c2 = arith.constant 2 : index
    %70 = arith.index_cast %3 : i32 to index
    %c0_18 = arith.constant 0 : index
    %71 = vector.load %arg2[%c2, %70, %c0_18] : memref<25x8x128xf32, #tpu.memory_space<vmem>>, vector<1x8x128xf32>
    %72 = vector.shape_cast %71 : vector<1x8x128xf32> to vector<8x128xf32>
    %73 = vector.shape_cast %69 : vector<8x128xf32> to vector<1x8x128xf32>
    tpu.vector_store %arg2[%c2, %70, %c0_18], %73 {strides = array<i32>} : memref<25x8x128xf32, #tpu.memory_space<vmem>>, vector<1x8x128xf32>,
    %cst_19 = arith.constant 0.488602519 : f32
    %74 = vector.broadcast %cst_19 : f32 to vector<8x128xf32>
    %75 = arith.mulf %74, %60 : vector<8x128xf32>
    %76 = arith.mulf %75, %47 : vector<8x128xf32>
    %c3 = arith.constant 3 : index
    %77 = arith.index_cast %3 : i32 to index
    %c0_20 = arith.constant 0 : index
    %78 = vector.load %arg2[%c3, %77, %c0_20] : memref<25x8x128xf32, #tpu.memory_space<vmem>>, vector<1x8x128xf32>
    %79 = vector.shape_cast %78 : vector<1x8x128xf32> to vector<8x128xf32>
    %80 = vector.shape_cast %76 : vector<8x128xf32> to vector<1x8x128xf32>
    tpu.vector_store %arg2[%c3, %77, %c0_20], %80 {strides = array<i32>} : memref<25x8x128xf32, #tpu.memory_space<vmem>>, vector<1x8x128xf32>,
    %81 = arith.mulf %47, %47 : vector<8x128xf32>
    %82 = arith.mulf %48, %48 : vector<8x128xf32>
    %83 = arith.subf %81, %82 : vector<8x128xf32>
    %84 = arith.mulf %48, %47 : vector<8x128xf32>
    %85 = arith.mulf %47, %48 : vector<8x128xf32>
    %86 = arith.addf %84, %85 : vector<8x128xf32>
    %cst_21 = arith.constant 3.000000e+00 : f32
    %87 = vector.broadcast %cst_21 : f32 to vector<8x128xf32>
    %88 = arith.mulf %87, %41 : vector<8x128xf32>
    %89 = arith.mulf %88, %57 : vector<8x128xf32>
    %cst_22 = arith.constant 1.000000e+00 : f32
    %90 = vector.broadcast %cst_22 : f32 to vector<8x128xf32>
    %91 = arith.mulf %90, %54 : vector<8x128xf32>
    %92 = arith.subf %89, %91 : vector<8x128xf32>
    %cst_23 = arith.constant 5.000000e-01 : f32
    %93 = vector.broadcast %cst_23 : f32 to vector<8x128xf32>
    %94 = arith.mulf %92, %93 : vector<8x128xf32>
    %cst_24 = arith.constant 3.000000e+00 : f32
    %95 = vector.broadcast %cst_24 : f32 to vector<8x128xf32>
    %96 = arith.mulf %95, %41 : vector<8x128xf32>
    %97 = arith.mulf %96, %60 : vector<8x128xf32>
    %cst_25 = arith.constant -3.000000e+00 : f32
    %98 = vector.broadcast %cst_25 : f32 to vector<8x128xf32>
    %99 = arith.mulf %98, %42 : vector<8x128xf32>
    %100 = arith.mulf %99, %60 : vector<8x128xf32>
    %cst_26 = arith.constant 0.1820914 : f32
    %101 = vector.broadcast %cst_26 : f32 to vector<8x128xf32>
    %102 = arith.mulf %101, %100 : vector<8x128xf32>
    %103 = arith.mulf %102, %86 : vector<8x128xf32>
    %c4 = arith.constant 4 : index
    %104 = arith.index_cast %3 : i32 to index
    %c0_27 = arith.constant 0 : index
    %105 = vector.load %arg2[%c4, %104, %c0_27] : memref<25x8x128xf32, #tpu.memory_space<vmem>>, vector<1x8x128xf32>
    %106 = vector.shape_cast %105 : vector<1x8x128xf32> to vector<8x128xf32>
    %107 = vector.shape_cast %103 : vector<8x128xf32> to vector<1x8x128xf32>
    tpu.vector_store %arg2[%c4, %104, %c0_27], %107 {strides = array<i32>} : memref<25x8x128xf32, #tpu.memory_space<vmem>>, vector<1x8x128xf32>,
    %cst_28 = arith.constant 0.3641828 : f32
    %108 = vector.broadcast %cst_28 : f32 to vector<8x128xf32>
    %109 = arith.mulf %108, %97 : vector<8x128xf32>
    %110 = arith.mulf %109, %48 : vector<8x128xf32>
    %c5 = arith.constant 5 : index
    %111 = arith.index_cast %3 : i32 to index
    %c0_29 = arith.constant 0 : index
    %112 = vector.load %arg2[%c5, %111, %c0_29] : memref<25x8x128xf32, #tpu.memory_space<vmem>>, vector<1x8x128xf32>
    %113 = vector.shape_cast %112 : vector<1x8x128xf32> to vector<8x128xf32>
    %114 = vector.shape_cast %110 : vector<8x128xf32> to vector<1x8x128xf32>
    tpu.vector_store %arg2[%c5, %111, %c0_29], %114 {strides = array<i32>} : memref<25x8x128xf32, #tpu.memory_space<vmem>>, vector<1x8x128xf32>,
    %cst_30 = arith.constant 0.63078314 : f32
    %115 = vector.broadcast %cst_30 : f32 to vector<8x128xf32>
    %116 = arith.mulf %115, %94 : vector<8x128xf32>
    %c6 = arith.constant 6 : index
    %117 = arith.index_cast %3 : i32 to index
    %c0_31 = arith.constant 0 : index
    %118 = vector.load %arg2[%c6, %117, %c0_31] : memref<25x8x128xf32, #tpu.memory_space<vmem>>, vector<1x8x128xf32>
    %119 = vector.shape_cast %118 : vector<1x8x128xf32> to vector<8x128xf32>
    %120 = vector.shape_cast %116 : vector<8x128xf32> to vector<1x8x128xf32>
    tpu.vector_store %arg2[%c6, %117, %c0_31], %120 {strides = array<i32>} : memref<25x8x128xf32, #tpu.memory_space<vmem>>, vector<1x8x128xf32>,
    %cst_32 = arith.constant 0.3641828 : f32
    %121 = vector.broadcast %cst_32 : f32 to vector<8x128xf32>
    %122 = arith.mulf %121, %97 : vector<8x128xf32>
    %123 = arith.mulf %122, %47 : vector<8x128xf32>
    %c7 = arith.constant 7 : index
    %124 = arith.index_cast %3 : i32 to index
    %c0_33 = arith.constant 0 : index
    %125 = vector.load %arg2[%c7, %124, %c0_33] : memref<25x8x128xf32, #tpu.memory_space<vmem>>, vector<1x8x128xf32>
    %126 = vector.shape_cast %125 : vector<1x8x128xf32> to vector<8x128xf32>
    %127 = vector.shape_cast %123 : vector<8x128xf32> to vector<1x8x128xf32>
    tpu.vector_store %arg2[%c7, %124, %c0_33], %127 {strides = array<i32>} : memref<25x8x128xf32, #tpu.memory_space<vmem>>, vector<1x8x128xf32>,
    %cst_34 = arith.constant 0.1820914 : f32
    %128 = vector.broadcast %cst_34 : f32 to vector<8x128xf32>
    %129 = arith.mulf %128, %100 : vector<8x128xf32>
    %130 = arith.mulf %129, %83 : vector<8x128xf32>
    %c8 = arith.constant 8 : index
    %131 = arith.index_cast %3 : i32 to index
    %c0_35 = arith.constant 0 : index
    %132 = vector.load %arg2[%c8, %131, %c0_35] : memref<25x8x128xf32, #tpu.memory_space<vmem>>, vector<1x8x128xf32>
    %133 = vector.shape_cast %132 : vector<1x8x128xf32> to vector<8x128xf32>
    %134 = vector.shape_cast %130 : vector<8x128xf32> to vector<1x8x128xf32>
    tpu.vector_store %arg2[%c8, %131, %c0_35], %134 {strides = array<i32>} : memref<25x8x128xf32, #tpu.memory_space<vmem>>, vector<1x8x128xf32>,
    %135 = arith.mulf %83, %47 : vector<8x128xf32>
    %136 = arith.mulf %86, %48 : vector<8x128xf32>
    %137 = arith.subf %135, %136 : vector<8x128xf32>
    %138 = arith.mulf %86, %47 : vector<8x128xf32>
    %139 = arith.mulf %83, %48 : vector<8x128xf32>
    %140 = arith.addf %138, %139 : vector<8x128xf32>
    %cst_36 = arith.constant 5.000000e+00 : f32
    %141 = vector.broadcast %cst_36 : f32 to vector<8x128xf32>
    %142 = arith.mulf %141, %41 : vector<8x128xf32>
    %143 = arith.mulf %142, %94 : vector<8x128xf32>
    %cst_37 = arith.constant 2.000000e+00 : f32
    %144 = vector.broadcast %cst_37 : f32 to vector<8x128xf32>
    %145 = arith.mulf %144, %57 : vector<8x128xf32>
    %146 = arith.subf %143, %145 : vector<8x128xf32>
    %cst_38 = arith.constant 0.333333343 : f32
    %147 = vector.broadcast %cst_38 : f32 to vector<8x128xf32>
    %148 = arith.mulf %146, %147 : vector<8x128xf32>
    %cst_39 = arith.constant 5.000000e+00 : f32
    %149 = vector.broadcast %cst_39 : f32 to vector<8x128xf32>
    %150 = arith.mulf %149, %41 : vector<8x128xf32>
    %151 = arith.mulf %150, %97 : vector<8x128xf32>
    %cst_40 = arith.constant 3.000000e+00 : f32
    %152 = vector.broadcast %cst_40 : f32 to vector<8x128xf32>
    %153 = arith.mulf %152, %60 : vector<8x128xf32>
    %154 = arith.subf %151, %153 : vector<8x128xf32>
    %cst_41 = arith.constant 5.000000e-01 : f32
    %155 = vector.broadcast %cst_41 : f32 to vector<8x128xf32>
    %156 = arith.mulf %154, %155 : vector<8x128xf32>
    %cst_42 = arith.constant 5.000000e+00 : f32
    %157 = vector.broadcast %cst_42 : f32 to vector<8x128xf32>
    %158 = arith.mulf %157, %41 : vector<8x128xf32>
    %159 = arith.mulf %158, %100 : vector<8x128xf32>
    %cst_43 = arith.constant -5.000000e+00 : f32
    %160 = vector.broadcast %cst_43 : f32 to vector<8x128xf32>
    %161 = arith.mulf %160, %42 : vector<8x128xf32>
    %162 = arith.mulf %161, %100 : vector<8x128xf32>
    %cst_44 = arith.constant 0.0393362381 : f32
    %163 = vector.broadcast %cst_44 : f32 to vector<8x128xf32>
    %164 = arith.mulf %163, %162 : vector<8x128xf32>
    %165 = arith.mulf %164, %140 : vector<8x128xf32>
    %c9 = arith.constant 9 : index
    %166 = arith.index_cast %3 : i32 to index
    %c0_45 = arith.constant 0 : index
    %167 = vector.load %arg2[%c9, %166, %c0_45] : memref<25x8x128xf32, #tpu.memory_space<vmem>>, vector<1x8x128xf32>
    %168 = vector.shape_cast %167 : vector<1x8x128xf32> to vector<8x128xf32>
    %169 = vector.shape_cast %165 : vector<8x128xf32> to vector<1x8x128xf32>
    tpu.vector_store %arg2[%c9, %166, %c0_45], %169 {strides = array<i32>} : memref<25x8x128xf32, #tpu.memory_space<vmem>>, vector<1x8x128xf32>,
    %cst_46 = arith.constant 0.0963537171 : f32
    %170 = vector.broadcast %cst_46 : f32 to vector<8x128xf32>
    %171 = arith.mulf %170, %159 : vector<8x128xf32>
    %172 = arith.mulf %171, %86 : vector<8x128xf32>
    %c10 = arith.constant 10 : index
    %173 = arith.index_cast %3 : i32 to index
    %c0_47 = arith.constant 0 : index
    %174 = vector.load %arg2[%c10, %173, %c0_47] : memref<25x8x128xf32, #tpu.memory_space<vmem>>, vector<1x8x128xf32>
    %175 = vector.shape_cast %174 : vector<1x8x128xf32> to vector<8x128xf32>
    %176 = vector.shape_cast %172 : vector<8x128xf32> to vector<1x8x128xf32>
    tpu.vector_store %arg2[%c10, %173, %c0_47], %176 {strides = array<i32>} : memref<25x8x128xf32, #tpu.memory_space<vmem>>, vector<1x8x128xf32>,
    %cst_48 = arith.constant 0.304697186 : f32
    %177 = vector.broadcast %cst_48 : f32 to vector<8x128xf32>
    %178 = arith.mulf %177, %156 : vector<8x128xf32>
    %179 = arith.mulf %178, %48 : vector<8x128xf32>
    %c11 = arith.constant 11 : index
    %180 = arith.index_cast %3 : i32 to index
    %c0_49 = arith.constant 0 : index
    %181 = vector.load %arg2[%c11, %180, %c0_49] : memref<25x8x128xf32, #tpu.memory_space<vmem>>, vector<1x8x128xf32>
    %182 = vector.shape_cast %181 : vector<1x8x128xf32> to vector<8x128xf32>
    %183 = vector.shape_cast %179 : vector<8x128xf32> to vector<1x8x128xf32>
    tpu.vector_store %arg2[%c11, %180, %c0_49], %183 {strides = array<i32>} : memref<25x8x128xf32, #tpu.memory_space<vmem>>, vector<1x8x128xf32>,
    %cst_50 = arith.constant 0.746352672 : f32
    %184 = vector.broadcast %cst_50 : f32 to vector<8x128xf32>
    %185 = arith.mulf %184, %148 : vector<8x128xf32>
    %c12 = arith.constant 12 : index
    %186 = arith.index_cast %3 : i32 to index
    %c0_51 = arith.constant 0 : index
    %187 = vector.load %arg2[%c12, %186, %c0_51] : memref<25x8x128xf32, #tpu.memory_space<vmem>>, vector<1x8x128xf32>
    %188 = vector.shape_cast %187 : vector<1x8x128xf32> to vector<8x128xf32>
    %189 = vector.shape_cast %185 : vector<8x128xf32> to vector<1x8x128xf32>
    tpu.vector_store %arg2[%c12, %186, %c0_51], %189 {strides = array<i32>} : memref<25x8x128xf32, #tpu.memory_space<vmem>>, vector<1x8x128xf32>,
    %cst_52 = arith.constant 0.304697186 : f32
    %190 = vector.broadcast %cst_52 : f32 to vector<8x128xf32>
    %191 = arith.mulf %190, %156 : vector<8x128xf32>
    %192 = arith.mulf %191, %47 : vector<8x128xf32>
    %c13 = arith.constant 13 : index
    %193 = arith.index_cast %3 : i32 to index
    %c0_53 = arith.constant 0 : index
    %194 = vector.load %arg2[%c13, %193, %c0_53] : memref<25x8x128xf32, #tpu.memory_space<vmem>>, vector<1x8x128xf32>
    %195 = vector.shape_cast %194 : vector<1x8x128xf32> to vector<8x128xf32>
    %196 = vector.shape_cast %192 : vector<8x128xf32> to vector<1x8x128xf32>
    tpu.vector_store %arg2[%c13, %193, %c0_53], %196 {strides = array<i32>} : memref<25x8x128xf32, #tpu.memory_space<vmem>>, vector<1x8x128xf32>,
    %cst_54 = arith.constant 0.0963537171 : f32
    %197 = vector.broadcast %cst_54 : f32 to vector<8x128xf32>
    %198 = arith.mulf %197, %159 : vector<8x128xf32>
    %199 = arith.mulf %198, %83 : vector<8x128xf32>
    %c14 = arith.constant 14 : index
    %200 = arith.index_cast %3 : i32 to index
    %c0_55 = arith.constant 0 : index
    %201 = vector.load %arg2[%c14, %200, %c0_55] : memref<25x8x128xf32, #tpu.memory_space<vmem>>, vector<1x8x128xf32>
    %202 = vector.shape_cast %201 : vector<1x8x128xf32> to vector<8x128xf32>
    %203 = vector.shape_cast %199 : vector<8x128xf32> to vector<1x8x128xf32>
    tpu.vector_store %arg2[%c14, %200, %c0_55], %203 {strides = array<i32>} : memref<25x8x128xf32, #tpu.memory_space<vmem>>, vector<1x8x128xf32>,
    %cst_56 = arith.constant 0.0393362381 : f32
    %204 = vector.broadcast %cst_56 : f32 to vector<8x128xf32>
    %205 = arith.mulf %204, %162 : vector<8x128xf32>
    %206 = arith.mulf %205, %137 : vector<8x128xf32>
    %c15 = arith.constant 15 : index
    %207 = arith.index_cast %3 : i32 to index
    %c0_57 = arith.constant 0 : index
    %208 = vector.load %arg2[%c15, %207, %c0_57] : memref<25x8x128xf32, #tpu.memory_space<vmem>>, vector<1x8x128xf32>
    %209 = vector.shape_cast %208 : vector<1x8x128xf32> to vector<8x128xf32>
    %210 = vector.shape_cast %206 : vector<8x128xf32> to vector<1x8x128xf32>
    tpu.vector_store %arg2[%c15, %207, %c0_57], %210 {strides = array<i32>} : memref<25x8x128xf32, #tpu.memory_space<vmem>>, vector<1x8x128xf32>,
    %211 = arith.mulf %137, %47 : vector<8x128xf32>
    %212 = arith.mulf %140, %48 : vector<8x128xf32>
    %213 = arith.subf %211, %212 : vector<8x128xf32>
    %214 = arith.mulf %140, %47 : vector<8x128xf32>
    %215 = arith.mulf %137, %48 : vector<8x128xf32>
    %216 = arith.addf %214, %215 : vector<8x128xf32>
    %cst_58 = arith.constant 7.000000e+00 : f32
    %217 = vector.broadcast %cst_58 : f32 to vector<8x128xf32>
    %218 = arith.mulf %217, %41 : vector<8x128xf32>
    %219 = arith.mulf %218, %148 : vector<8x128xf32>
    %cst_59 = arith.constant 3.000000e+00 : f32
    %220 = vector.broadcast %cst_59 : f32 to vector<8x128xf32>
    %221 = arith.mulf %220, %94 : vector<8x128xf32>
    %222 = arith.subf %219, %221 : vector<8x128xf32>
    %cst_60 = arith.constant 2.500000e-01 : f32
    %223 = vector.broadcast %cst_60 : f32 to vector<8x128xf32>
    %224 = arith.mulf %222, %223 : vector<8x128xf32>
    %cst_61 = arith.constant 7.000000e+00 : f32
    %225 = vector.broadcast %cst_61 : f32 to vector<8x128xf32>
    %226 = arith.mulf %225, %41 : vector<8x128xf32>
    %227 = arith.mulf %226, %156 : vector<8x128xf32>
    %cst_62 = arith.constant 4.000000e+00 : f32
    %228 = vector.broadcast %cst_62 : f32 to vector<8x128xf32>
    %229 = arith.mulf %228, %97 : vector<8x128xf32>
    %230 = arith.subf %227, %229 : vector<8x128xf32>
    %cst_63 = arith.constant 0.333333343 : f32
    %231 = vector.broadcast %cst_63 : f32 to vector<8x128xf32>
    %232 = arith.mulf %230, %231 : vector<8x128xf32>
    %cst_64 = arith.constant 7.000000e+00 : f32
    %233 = vector.broadcast %cst_64 : f32 to vector<8x128xf32>
    %234 = arith.mulf %233, %41 : vector<8x128xf32>
    %235 = arith.mulf %234, %159 : vector<8x128xf32>
    %cst_65 = arith.constant 5.000000e+00 : f32
    %236 = vector.broadcast %cst_65 : f32 to vector<8x128xf32>
    %237 = arith.mulf %236, %100 : vector<8x128xf32>
    %238 = arith.subf %235, %237 : vector<8x128xf32>
    %cst_66 = arith.constant 5.000000e-01 : f32
    %239 = vector.broadcast %cst_66 : f32 to vector<8x128xf32>
    %240 = arith.mulf %238, %239 : vector<8x128xf32>
    %cst_67 = arith.constant 7.000000e+00 : f32
    %241 = vector.broadcast %cst_67 : f32 to vector<8x128xf32>
    %242 = arith.mulf %241, %41 : vector<8x128xf32>
    %243 = arith.mulf %242, %162 : vector<8x128xf32>
    %cst_68 = arith.constant -7.000000e+00 : f32
    %244 = vector.broadcast %cst_68 : f32 to vector<8x128xf32>
    %245 = arith.mulf %244, %42 : vector<8x128xf32>
    %246 = arith.mulf %245, %162 : vector<8x128xf32>
    %cst_69 = arith.constant 5.960340e-03 : f32
    %247 = vector.broadcast %cst_69 : f32 to vector<8x128xf32>
    %248 = arith.mulf %247, %246 : vector<8x128xf32>
    %249 = arith.mulf %248, %216 : vector<8x128xf32>
    %c16 = arith.constant 16 : index
    %250 = arith.index_cast %3 : i32 to index
    %c0_70 = arith.constant 0 : index
    %251 = vector.load %arg2[%c16, %250, %c0_70] : memref<25x8x128xf32, #tpu.memory_space<vmem>>, vector<1x8x128xf32>
    %252 = vector.shape_cast %251 : vector<1x8x128xf32> to vector<8x128xf32>
    %253 = vector.shape_cast %249 : vector<8x128xf32> to vector<1x8x128xf32>
    tpu.vector_store %arg2[%c16, %250, %c0_70], %253 {strides = array<i32>} : memref<25x8x128xf32, #tpu.memory_space<vmem>>, vector<1x8x128xf32>,
    %cst_71 = arith.constant 0.0168583877 : f32
    %254 = vector.broadcast %cst_71 : f32 to vector<8x128xf32>
    %255 = arith.mulf %254, %243 : vector<8x128xf32>
    %256 = arith.mulf %255, %140 : vector<8x128xf32>
    %c17 = arith.constant 17 : index
    %257 = arith.index_cast %3 : i32 to index
    %c0_72 = arith.constant 0 : index
    %258 = vector.load %arg2[%c17, %257, %c0_72] : memref<25x8x128xf32, #tpu.memory_space<vmem>>, vector<1x8x128xf32>
    %259 = vector.shape_cast %258 : vector<1x8x128xf32> to vector<8x128xf32>
    %260 = vector.shape_cast %256 : vector<8x128xf32> to vector<1x8x128xf32>
    tpu.vector_store %arg2[%c17, %257, %c0_72], %260 {strides = array<i32>} : memref<25x8x128xf32, #tpu.memory_space<vmem>>, vector<1x8x128xf32>,
    %cst_73 = arith.constant 0.063078314 : f32
    %261 = vector.broadcast %cst_73 : f32 to vector<8x128xf32>
    %262 = arith.mulf %261, %240 : vector<8x128xf32>
    %263 = arith.mulf %262, %86 : vector<8x128xf32>
    %c18 = arith.constant 18 : index
    %264 = arith.index_cast %3 : i32 to index
    %c0_74 = arith.constant 0 : index
    %265 = vector.load %arg2[%c18, %264, %c0_74] : memref<25x8x128xf32, #tpu.memory_space<vmem>>, vector<1x8x128xf32>
    %266 = vector.shape_cast %265 : vector<1x8x128xf32> to vector<8x128xf32>
    %267 = vector.shape_cast %263 : vector<8x128xf32> to vector<1x8x128xf32>
    tpu.vector_store %arg2[%c18, %264, %c0_74], %267 {strides = array<i32>} : memref<25x8x128xf32, #tpu.memory_space<vmem>>, vector<1x8x128xf32>,
    %cst_75 = arith.constant 0.267618626 : f32
    %268 = vector.broadcast %cst_75 : f32 to vector<8x128xf32>
    %269 = arith.mulf %268, %232 : vector<8x128xf32>
    %270 = arith.mulf %269, %48 : vector<8x128xf32>
    %c19 = arith.constant 19 : index
    %271 = arith.index_cast %3 : i32 to index
    %c0_76 = arith.constant 0 : index
    %272 = vector.load %arg2[%c19, %271, %c0_76] : memref<25x8x128xf32, #tpu.memory_space<vmem>>, vector<1x8x128xf32>
    %273 = vector.shape_cast %272 : vector<1x8x128xf32> to vector<8x128xf32>
    %274 = vector.shape_cast %270 : vector<8x128xf32> to vector<1x8x128xf32>
    tpu.vector_store %arg2[%c19, %271, %c0_76], %274 {strides = array<i32>} : memref<25x8x128xf32, #tpu.memory_space<vmem>>, vector<1x8x128xf32>,
    %cst_77 = arith.constant 0.846284389 : f32
    %275 = vector.broadcast %cst_77 : f32 to vector<8x128xf32>
    %276 = arith.mulf %275, %224 : vector<8x128xf32>
    %c20 = arith.constant 20 : index
    %277 = arith.index_cast %3 : i32 to index
    %c0_78 = arith.constant 0 : index
    %278 = vector.load %arg2[%c20, %277, %c0_78] : memref<25x8x128xf32, #tpu.memory_space<vmem>>, vector<1x8x128xf32>
    %279 = vector.shape_cast %278 : vector<1x8x128xf32> to vector<8x128xf32>
    %280 = vector.shape_cast %276 : vector<8x128xf32> to vector<1x8x128xf32>
    tpu.vector_store %arg2[%c20, %277, %c0_78], %280 {strides = array<i32>} : memref<25x8x128xf32, #tpu.memory_space<vmem>>, vector<1x8x128xf32>,
    %cst_79 = arith.constant 0.267618626 : f32
    %281 = vector.broadcast %cst_79 : f32 to vector<8x128xf32>
    %282 = arith.mulf %281, %232 : vector<8x128xf32>
    %283 = arith.mulf %282, %47 : vector<8x128xf32>
    %c21 = arith.constant 21 : index
    %284 = arith.index_cast %3 : i32 to index
    %c0_80 = arith.constant 0 : index
    %285 = vector.load %arg2[%c21, %284, %c0_80] : memref<25x8x128xf32, #tpu.memory_space<vmem>>, vector<1x8x128xf32>
    %286 = vector.shape_cast %285 : vector<1x8x128xf32> to vector<8x128xf32>
    %287 = vector.shape_cast %283 : vector<8x128xf32> to vector<1x8x128xf32>
    tpu.vector_store %arg2[%c21, %284, %c0_80], %287 {strides = array<i32>} : memref<25x8x128xf32, #tpu.memory_space<vmem>>, vector<1x8x128xf32>,
    %cst_81 = arith.constant 0.063078314 : f32
    %288 = vector.broadcast %cst_81 : f32 to vector<8x128xf32>
    %289 = arith.mulf %288, %240 : vector<8x128xf32>
    %290 = arith.mulf %289, %83 : vector<8x128xf32>
    %c22 = arith.constant 22 : index
    %291 = arith.index_cast %3 : i32 to index
    %c0_82 = arith.constant 0 : index
    %292 = vector.load %arg2[%c22, %291, %c0_82] : memref<25x8x128xf32, #tpu.memory_space<vmem>>, vector<1x8x128xf32>
    %293 = vector.shape_cast %292 : vector<1x8x128xf32> to vector<8x128xf32>
    %294 = vector.shape_cast %290 : vector<8x128xf32> to vector<1x8x128xf32>
    tpu.vector_store %arg2[%c22, %291, %c0_82], %294 {strides = array<i32>} : memref<25x8x128xf32, #tpu.memory_space<vmem>>, vector<1x8x128xf32>,
    %cst_83 = arith.constant 0.0168583877 : f32
    %295 = vector.broadcast %cst_83 : f32 to vector<8x128xf32>
    %296 = arith.mulf %295, %243 : vector<8x128xf32>
    %297 = arith.mulf %296, %137 : vector<8x128xf32>
    %c23 = arith.constant 23 : index
    %298 = arith.index_cast %3 : i32 to index
    %c0_84 = arith.constant 0 : index
    %299 = vector.load %arg2[%c23, %298, %c0_84] : memref<25x8x128xf32, #tpu.memory_space<vmem>>, vector<1x8x128xf32>
    %300 = vector.shape_cast %299 : vector<1x8x128xf32> to vector<8x128xf32>
    %301 = vector.shape_cast %297 : vector<8x128xf32> to vector<1x8x128xf32>
    tpu.vector_store %arg2[%c23, %298, %c0_84], %301 {strides = array<i32>} : memref<25x8x128xf32, #tpu.memory_space<vmem>>, vector<1x8x128xf32>,
    %cst_85 = arith.constant 5.960340e-03 : f32
    %302 = vector.broadcast %cst_85 : f32 to vector<8x128xf32>
    %303 = arith.mulf %302, %246 : vector<8x128xf32>
    %304 = arith.mulf %303, %213 : vector<8x128xf32>
    %c24 = arith.constant 24 : index
    %305 = arith.index_cast %3 : i32 to index
    %c0_86 = arith.constant 0 : index
    %306 = vector.load %arg2[%c24, %305, %c0_86] : memref<25x8x128xf32, #tpu.memory_space<vmem>>, vector<1x8x128xf32>
    %307 = vector.shape_cast %306 : vector<1x8x128xf32> to vector<8x128xf32>
    %308 = vector.shape_cast %304 : vector<8x128xf32> to vector<1x8x128xf32>
    tpu.vector_store %arg2[%c24, %305, %c0_86], %308 {strides = array<i32>} : memref<25x8x128xf32, #tpu.memory_space<vmem>>, vector<1x8x128xf32>,
    %c1_i32_87 = arith.constant 1 : i32
    return
  }
  func.func @transform_0(%arg0: i32) -> (i32, i32, i32) {
    %c0_i32 = arith.constant 0 : i32
    %c0_i32_0 = arith.constant 0 : i32
    %c0_i32_1 = arith.constant 0 : i32
    return %c0_i32, %arg0, %c0_i32_0 : i32, i32, i32
  }
  func.func @transform_1(%arg0: i32) -> (i32, i32, i32) {
    %c0_i32 = arith.constant 0 : i32
    %c0_i32_0 = arith.constant 0 : i32
    %c0_i32_1 = arith.constant 0 : i32
    return %c0_i32, %arg0, %c0_i32_0 : i32, i32, i32
  }
}

</mosaic_0001>

<llo_original>
// kernel: tpu_custom_call.1
$region0: #{tpu_custom_call.1}
  #allocation0 [shape = 'u32[]', space=smem, size = 0x4, offset = 0x4, fixed_abs, tag = 'smem constant byte address 0x4 - core index']
  #allocation1 [shape = 'u32[144,128]{1,0:T(1,128)}', space=vmem, size = 0x12000, scoped, tag = 'internal scratch']
  %s0 = inlined_call_operand.hbm [shape: f32[6,8,128], index: 0, kind: input, shape index: {}]
  %s1 = inlined_call_operand.hbm [shape: f32[25,8,128], index: 1, kind: output, shape index: {}]
  %s2 = sld [smem:[#allocation0]]
  $region18: #{tpu_custom_call.1} parent=0
    _
  %s4 = ssub.s32 1, %s2
  %s5 = scalar_select 0, %s4, %s2
  $region1: #{tpu_custom_call.1} parent=0
    #allocation2 [shape = 'u8[24576]{0}', space=vmem, size = 0x6000, scoped, tag = 'input window, operand 0, single buffered']
    #allocation3 [shape = 's32[1]{0}', space=sflag, size = 0x4, scoped, tag = 'scoped memory for tpu_custom_call.1']
    #allocation4 [shape = 's32[1]{0}', space=sflag, size = 0x4, scoped, tag = 'scoped memory for tpu_custom_call.1']
    #allocation5 [shape = 'u8[102400]{0}', space=vmem, size = 0x19000, scoped, tag = 'output window, operand 0, single buffered']
    %6 = vsyncpa [#allocation3], 0
    %7 = vsyncpa [#allocation4], 0
    // Predicated region
    $region2: #{tpu_custom_call.1} parent=1 // pred_check
      _
    $region3: #{tpu_custom_call.1} parent=1 // pred_check_branch
      %9 = sbr.rel (0) target = $region5
    $region4: #{tpu_custom_call.1} parent=1 // pred_region
      %s11 = ssub.s32 768, 768
      %12 = vsyncadd [#allocation3], %s11
      %s13 = sshll.u32 [#allocation2], 4
      %s14 = int_to_ptr.vmem [resolvable:$true] %s13
      %19 = dma.hbm_to_vmem [thread:$0]  %s0, 768, %s14, [#allocation3], 128, 128, 8
    $region5: #{tpu_custom_call.1} parent=1 // pred_fallthru
      _
    // Predicated region
    $region6: #{tpu_custom_call.1} parent=1 // pred_check
      _
    $region7: #{tpu_custom_call.1} parent=1 // pred_check_branch
      %21 = sbr.rel (0) target = $region9
    $region8: #{tpu_custom_call.1} parent=1 // pred_region
      %22 = dma.done [#allocation3], 768
    $region9: #{tpu_custom_call.1} parent=1 // pred_fallthru
      _
    %v23 = vld [vmem:[#allocation2] sm:$0xff]
    %v24 = vld [vmem:[#allocation2 + $0x8] sm:$0xff]
    %v25 = vld [vmem:[#allocation2 + $0x10] sm:$0xff]
    %v26 = vld [vmem:[#allocation2 + $0x18] sm:$0xff]
    %v27 = vld [vmem:[#allocation2 + $0x20] sm:$0xff]
    %v28 = vld [vmem:[#allocation2 + $0x28] sm:$0xff]
    %v29 = vsub.f32 %v24, %v27
    %v30 = vsub.f32 %v25, %v28
    %v31 = vsub.f32 %v23, %v26
    %v32 = vmul.f32 %v29, %v29
    %v33 = vmul.f32 %v30, %v30
    %v34 = vadd.f32 %v32, %v33
    %v35 = vmul.f32 %v31, %v31
    %v36 = vadd.f32 %v34, %v35
    %vm37 = vcmp.gt.f32.partialorder %v36, 0.0
    %v38 = vrsqrt.pop %v36
    %v39 = vsel %vm37, %v38, 0.0
    %vm40 = vcmp.gt.f32.partialorder %v34, 0.0
    %v41 = vrsqrt.pop %v34
    %v42 = vsel %vm40, %v41, 0.0
    %v43 = vmul.f32 %v34, %v42
    %v44 = vmul.f32 %v31, %v39
    %v45 = vsel %vm37, %v44, 1.0
    %v46 = vmul.f32 %v43, %v39
    %v47 = vmul.f32 %v29, %v42
    %v48 = vsel %vm40, %v47, 1.0
    %v49 = vmul.f32 %v30, %v42
    %50 = vst [vmem:[#allocation5] sm:$0xff] 0.2820948
    %v51 = vmul.f32 %v46, -1.0
    %v52 = vmul.f32 %v51, 0.48860252
    %v53 = vmul.f32 %v52, %v49
    %s54 = sadd.s32 0, 8
    %s55 = scalar_lea.vmem [#allocation5], %s54
    %56 = vst [vmem:[%s55] sm:$0xff] %v53
    %v57 = vmul.f32 %v45, 0.48860252
    %s58 = sadd.s32 0, 16
    %s59 = scalar_lea.vmem [#allocation5], %s58
    %60 = vst [vmem:[%s59] sm:$0xff] %v57
    %v61 = vmul.f32 %v52, %v48
    %s62 = sadd.s32 0, 24
    %s63 = scalar_lea.vmem [#allocation5], %s62
    %64 = vst [vmem:[%s63] sm:$0xff] %v61
    %v65 = vmul.f32 %v48, %v48
    %v66 = vmul.f32 %v49, %v49
    %v67 = vsub.f32 %v65, %v66
    %v68 = vmul.f32 %v49, %v48
    %v69 = vadd.f32 %v68, %v68
    %v70 = vmul.f32 %v45, 3.0
    %v71 = vmul.f32 %v70, %v45
    %v72 = vsub.f32 %v71, 1.0
    %v73 = vmul.f32 %v72, 0.5
    %v74 = vmul.f32 %v70, %v51
    %v75 = vmul.f32 %v46, -3.0
    %v76 = vmul.f32 %v75, %v51
    %v77 = vmul.f32 %v76, 0.1820914
    %v78 = vmul.f32 %v77, %v69
    %s79 = sadd.s32 0, 32
    %s80 = scalar_lea.vmem [#allocation5], %s79
    %81 = vst [vmem:[%s80] sm:$0xff] %v78
    %v82 = vmul.f32 %v74, 0.3641828
    %v83 = vmul.f32 %v82, %v49
    %s84 = sadd.s32 0, 40
    %s85 = scalar_lea.vmem [#allocation5], %s84
    %86 = vst [vmem:[%s85] sm:$0xff] %v83
    %v87 = vmul.f32 %v73, 0.63078314
    %s88 = sadd.s32 0, 48
    %s89 = scalar_lea.vmem [#allocation5], %s88
    %90 = vst [vmem:[%s89] sm:$0xff] %v87
    %v91 = vmul.f32 %v82, %v48
    %s92 = sadd.s32 0, 56
    %s93 = scalar_lea.vmem [#allocation5], %s92
    %94 = vst [vmem:[%s93] sm:$0xff] %v91
    %v95 = vmul.f32 %v77, %v67
    %s96 = sadd.s32 0, 64
    %s97 = scalar_lea.vmem [#allocation5], %s96
    %98 = vst [vmem:[%s97] sm:$0xff] %v95
    %v99 = vmul.f32 %v67, %v48
    %v100 = vmul.f32 %v69, %v49
    %v101 = vsub.f32 %v99, %v100
    %v102 = vmul.f32 %v69, %v48
    %v103 = vmul.f32 %v67, %v49
    %v104 = vadd.f32 %v102, %v103
    %v105 = vmul.f32 %v45, 5.0
    %v106 = vmul.f32 %v105, %v73
    %v107 = vmul.f32 %v45, 2.0
    %v108 = vsub.f32 %v106, %v107
    %v109 = vmul.f32 %v108, 0.33333334
    %v110 = vmul.f32 %v105, %v74
    %v111 = vmul.f32 %v51, 3.0
    %v112 = vsub.f32 %v110, %v111
    %v113 = vmul.f32 %v112, 0.5
    %v114 = vmul.f32 %v105, %v76
    %v115 = vmul.f32 %v46, -5.0
    %v116 = vmul.f32 %v115, %v76
    %v117 = vmul.f32 %v116, 0.039336238
    %v118 = vmul.f32 %v117, %v104
    %s119 = sadd.s32 0, 72
    %s120 = scalar_lea.vmem [#allocation5], %s119
    %121 = vst [vmem:[%s120] sm:$0xff] %v118
    %v122 = vmul.f32 %v114, 0.09635372
    %v123 = vmul.f32 %v122, %v69
    %s124 = sadd.s32 0, 80
    %s125 = scalar_lea.vmem [#allocation5], %s124
    %126 = vst [vmem:[%s125] sm:$0xff] %v123
    %v127 = vmul.f32 %v113, 0.3046972
    %v128 = vmul.f32 %v127, %v49
    %s129 = sadd.s32 0, 88
    %s130 = scalar_lea.vmem [#allocation5], %s129
    %131 = vst [vmem:[%s130] sm:$0xff] %v128
    %v132 = vmul.f32 %v109, 0.7463527
    %s133 = sadd.s32 0, 96
    %s134 = scalar_lea.vmem [#allocation5], %s133
    %135 = vst [vmem:[%s134] sm:$0xff] %v132
    %v136 = vmul.f32 %v127, %v48
    %s137 = sadd.s32 0, 104
    %s138 = scalar_lea.vmem [#allocation5], %s137
    %139 = vst [vmem:[%s138] sm:$0xff] %v136
    %v140 = vmul.f32 %v122, %v67
    %s141 = sadd.s32 0, 112
    %s142 = scalar_lea.vmem [#allocation5], %s141
    %143 = vst [vmem:[%s142] sm:$0xff] %v140
    %v144 = vmul.f32 %v117, %v101
    %s145 = sadd.s32 0, 120
    %s146 = scalar_lea.vmem [#allocation5], %s145
    %147 = vst [vmem:[%s146] sm:$0xff] %v144
    %v148 = vmul.f32 %v101, %v48
    %v149 = vmul.f32 %v104, %v49
    %v150 = vsub.f32 %v148, %v149
    %v151 = vmul.f32 %v104, %v48
    %v152 = vmul.f32 %v101, %v49
    %v153 = vadd.f32 %v151, %v152
    %v154 = vmul.f32 %v45, 7.0
    %v155 = vmul.f32 %v154, %v109
    %v156 = vmul.f32 %v73, 3.0
    %v157 = vsub.f32 %v155, %v156
    %v158 = vmul.f32 %v157, 0.25
    %v159 = vmul.f32 %v154, %v113
    %v160 = vmul.f32 %v74, 4.0
    %v161 = vsub.f32 %v159, %v160
    %v162 = vmul.f32 %v161, 0.33333334
    %v163 = vmul.f32 %v154, %v114
    %v164 = vmul.f32 %v76, 5.0
    %v165 = vsub.f32 %v163, %v164
    %v166 = vmul.f32 %v165, 0.5
    %v167 = vmul.f32 %v154, %v116
    %v168 = vmul.f32 %v46, -7.0
    %v169 = vmul.f32 %v168, %v116
    %v170 = vmul.f32 %v169, 0.00596034
    %v171 = vmul.f32 %v170, %v153
    %s172 = sadd.s32 0, 128
    %s173 = scalar_lea.vmem [#allocation5], %s172
    %174 = vst [vmem:[%s173] sm:$0xff] %v171
    %v175 = vmul.f32 %v167, 0.016858388
    %v176 = vmul.f32 %v175, %v104
    %s177 = sadd.s32 0, 136
    %s178 = scalar_lea.vmem [#allocation5], %s177
    %179 = vst [vmem:[%s178] sm:$0xff] %v176
    %v180 = vmul.f32 %v166, 0.063078314
    %v181 = vmul.f32 %v180, %v69
    %s182 = sadd.s32 0, 144
    %s183 = scalar_lea.vmem [#allocation5], %s182
    %184 = vst [vmem:[%s183] sm:$0xff] %v181
    %v185 = vmul.f32 %v162, 0.26761863
    %v186 = vmul.f32 %v185, %v49
    %s187 = sadd.s32 0, 152
    %s188 = scalar_lea.vmem [#allocation5], %s187
    %189 = vst [vmem:[%s188] sm:$0xff] %v186
    %v190 = vmul.f32 %v158, 0.8462844
    %s191 = sadd.s32 0, 160
    %s192 = scalar_lea.vmem [#allocation5], %s191
    %193 = vst [vmem:[%s192] sm:$0xff] %v190
    %v194 = vmul.f32 %v185, %v48
    %s195 = sadd.s32 0, 168
    %s196 = scalar_lea.vmem [#allocation5], %s195
    %197 = vst [vmem:[%s196] sm:$0xff] %v194
    %v198 = vmul.f32 %v180, %v67
    %s199 = sadd.s32 0, 176
    %s200 = scalar_lea.vmem [#allocation5], %s199
    %201 = vst [vmem:[%s200] sm:$0xff] %v198
    %v202 = vmul.f32 %v175, %v101
    %s203 = sadd.s32 0, 184
    %s204 = scalar_lea.vmem [#allocation5], %s203
    %205 = vst [vmem:[%s204] sm:$0xff] %v202
    %v206 = vmul.f32 %v170, %v150
    %s207 = sadd.s32 0, 192
    %s208 = scalar_lea.vmem [#allocation5], %s207
    %209 = vst [vmem:[%s208] sm:$0xff] %v206
    // Predicated region
    $region10: #{tpu_custom_call.1} parent=1 // pred_check
      _
    $region11: #{tpu_custom_call.1} parent=1 // pred_check_branch
      %211 = sbr.rel (0) target = $region13
    $region12: #{tpu_custom_call.1} parent=1 // pred_region
      %s213 = ssub.s32 3200, 3200
      %214 = vsyncadd [#allocation4], %s213
      %s215 = sshll.u32 [#allocation5], 4
      %s216 = int_to_ptr.vmem [resolvable:$true] %s215
      %221 = dma.vmem_to_hbm [thread:$0]  %s216, 3200, %s1, [#allocation4], 128, 128, 8
    $region13: #{tpu_custom_call.1} parent=1 // pred_fallthru
      _
    // Predicated region
    $region14: #{tpu_custom_call.1} parent=1 // pred_check
      _
    $region15: #{tpu_custom_call.1} parent=1 // pred_check_branch
      %223 = sbr.rel (0) target = $region17
    $region16: #{tpu_custom_call.1} parent=1 // pred_region
      %224 = dma.done [#allocation4], 3200
    $region17: #{tpu_custom_call.1} parent=1 // pred_fallthru
      _
    %225 = vsyncpa [#allocation3], 1
    %226 = vsyncpa [#allocation4], 1

</llo_original>
